<compile_context>
chip_gen: v5e
topology: v5e:2x2
jax: 0.10.0
libtpu: 0.0.40
codegen_flags: <defaults>
</compile_context>

<pallas_src>
import functools

import jax
import jax.numpy as jnp
from jax.experimental import pallas as pl
from jax.experimental.pallas import tpu as pltpu


def _complex_conv_kernel(x_ref, halo_ref, w_ref, b_ref, o_ref, *, tap_offsets):
    """One grid step: one output tile of the folded complex convolution.

    x_ref:    (Cin2, TM)            main input tile (channel-major flat stream)
    halo_ref: (Cin2, HALO)          next HALO columns of the same stream (halo)
    w_ref:    (Cout2, kh*kw*Cin2)   folded weights, tap-major on the K axis
    b_ref:    (Cout2, 1)            folded bias
    o_ref:    (Cout2, TM)           output tile (lane-dense)
    """
    tm = o_ref.shape[-1]
    # Resident window covering all tap offsets for this tile.
    x_win = jnp.concatenate([x_ref[...], halo_ref[...]], axis=-1)     # (Cin2, TM+HALO)
    # im2col slab: stack the tap-shifted views along the contraction axis.
    slab = jnp.concatenate([x_win[:, off:off + tm] for off in tap_offsets], axis=0)
    # Single fat-K MXU matmul per tile.
    acc = jnp.dot(w_ref[...], slab, preferred_element_type=jnp.float32)
    o_ref[...] = (acc + b_ref[...]).astype(o_ref.dtype)


def complex_conv2d_encoder(x, w_real, b_real, w_imag, b_imag,
                           *, stride=(1, 1), padding=(0, 0), dilation=(1, 1),
                           tm_target=512):
    """x: (B, Cin, H, W, 2) float32 -> (B, 2*Cout, H_out, min(W_out, W)) float32."""
    B, Cin, H, W, _ = x.shape
    Co = w_real.shape[0]
    kh, kw = w_real.shape[2], w_real.shape[3]
    sh, sw = stride
    ph, pw = padding
    dh, dw = dilation
    Cin2, Cout2 = 2 * Cin, 2 * Co

    # ---- fold complex arithmetic into the channel axes -------------------------------
    xs = jnp.concatenate([x[..., 0], x[..., 1]], axis=1)            # (B, 2Cin, H, W)
    xs = jnp.pad(xs, ((0, 0), (0, 0), (ph, ph), (pw, pw)))          # (B, 2Cin, Hp, Wp)
    Hp, Wp = H + 2 * ph, W + 2 * pw
    M = B * Hp * Wp
    # channel-major flat stream: lane axis = spatial position
    x_cm = jnp.transpose(xs, (1, 0, 2, 3)).reshape(Cin2, M)          # (Cin2, M)

    # Folded weight:  row block [0:Co)  -> [ Wr | -Wi ]   (out_real)
    #                 row block [Co:2Co)-> [ Wi |  Wr ]   (out_imag)
    w_top = jnp.concatenate([w_real, -w_imag], axis=1)               # (Co, 2Cin, kh, kw)
    w_bot = jnp.concatenate([w_imag,  w_real], axis=1)               # (Co, 2Cin, kh, kw)
    w_fold = jnp.concatenate([w_top, w_bot], axis=0)                 # (2Co, 2Cin, kh, kw)
    # tap-major K axis: (Cout2, kh, kw, Cin2) -> (Cout2, kh*kw*Cin2)
    w_mat = jnp.transpose(w_fold, (0, 2, 3, 1)).reshape(Cout2, kh * kw * Cin2)
    b_fold = jnp.concatenate([b_real - b_imag, b_real + b_imag]).reshape(Cout2, 1)

    # ---- tiling along the flat-position (lane) axis -----------------------------------
    max_off = (kh - 1) * dh * Wp + (kw - 1) * dw                     # largest tap shift
    HALO = max(128, ((max_off + 127) // 128) * 128)                  # 128-aligned halo
    TM = max(HALO, ((tm_target + HALO - 1) // HALO) * HALO)          # HALO | TM, 128 | TM
    n_tiles = (M + TM - 1) // TM
    Mp = n_tiles * TM
    x_cm = jnp.pad(x_cm, ((0, 0), (0, Mp + HALO - M)))               # (Cin2, Mp + HALO)

    tap_offsets = tuple(dy * dh * Wp + dx * dw
                        for dy in range(kh) for dx in range(kw))

    out_flat = pl.pallas_call(
        functools.partial(_complex_conv_kernel, tap_offsets=tap_offsets),
        out_shape=jax.ShapeDtypeStruct((Cout2, Mp), jnp.float32),
        grid=(n_tiles,),
        in_specs=[
            pl.BlockSpec((Cin2, TM), lambda i: (0, i)),                       # main tile
            pl.BlockSpec((Cin2, HALO), lambda i: (0, (i + 1) * (TM // HALO))),  # halo
            pl.BlockSpec((Cout2, kh * kw * Cin2), lambda i: (0, 0)),          # weights
            pl.BlockSpec((Cout2, 1), lambda i: (0, 0)),                       # bias
        ],
        out_specs=pl.BlockSpec((Cout2, TM), lambda i: (0, i)),
        compiler_params=pltpu.CompilerParams(
            dimension_semantics=("parallel",),
            vmem_limit_bytes=32 * 1024 * 1024,
        ),
    )(x_cm, x_cm, w_mat, b_fold)

    # ---- unflatten, keep valid stride-1 positions, apply stride, crop W ---------------
    H1 = Hp - dh * (kh - 1)                                          # stride-1 out height
    W1 = Wp - dw * (kw - 1)                                          # stride-1 out width
    y = out_flat[:, :M].reshape(Cout2, B, Hp, Wp)
    y = y[:, :, :H1:sh, :W1:sw]                                      # (Cout2, B, Ho, Wo)
    y = y[..., :W]                                                   # PyTorch crop [..., :W]
    # Channels are already [out_real ; out_imag]; just move them to dim 1.
    return jnp.transpose(y, (1, 0, 2, 3))                            # (B, 2Co, Ho, Wc)


# ---------------------------------------------------------------------------
# Pure-JAX reference (mirrors the PyTorch module) for verification.
# ---------------------------------------------------------------------------
def _conv2d_nchw(x, w, b, *, stride, padding, dilation):
    out = jax.lax.conv_general_dilated(
        x, w, window_strides=stride,
        padding=[(padding[0], padding[0]), (padding[1], padding[1])],
        rhs_dilation=dilation,
        dimension_numbers=("NCHW", "OIHW", "NCHW"),
        precision=jax.lax.Precision.HIGHEST)
    return out + b[None, :, None, None]


def reference_forward(x, w_real, b_real, w_imag, b_imag, *, stride, padding, dilation):
    xr, xi = x[..., 0], x[..., 1]
    W = x.shape[3]
    conv = functools.partial(_conv2d_nchw, stride=stride, padding=padding,
                             dilation=dilation)
    out_real = conv(xr, w_real, b_real) - conv(xi, w_imag, b_imag)
    out_imag = conv(xi, w_real, b_real) + conv(xr, w_imag, b_imag)
    return jnp.concatenate([out_real[..., :W], out_imag[..., :W]], axis=1)


if __name__ == "__main__":
    # Small shapes consistent with the module: (B, Cin, H, W, 2) complex-as-last-dim input.
    B, Cin, Co, H, W = 2, 4, 8, 16, 16
    kernel_size, stride, padding, dilation = (3, 2), (1, 1), (1, 1), (1, 1)

    key = jax.random.PRNGKey(0)
    kx, kwr, kbr, kwi, kbi = jax.random.split(key, 5)
    x = jax.random.normal(kx, (B, Cin, H, W, 2), jnp.float32)

    fan_in = Cin * kernel_size[0] * kernel_size[1]
    scale = 1.0 / jnp.sqrt(jnp.float32(fan_in))
    w_real = jax.random.uniform(kwr, (Co, Cin) + kernel_size, jnp.float32, -scale, scale)
    b_real = jax.random.uniform(kbr, (Co,), jnp.float32, -scale, scale)
    w_imag = jax.random.uniform(kwi, (Co, Cin) + kernel_size, jnp.float32, -scale, scale)
    b_imag = jax.random.uniform(kbi, (Co,), jnp.float32, -scale, scale)

    fwd = jax.jit(functools.partial(complex_conv2d_encoder,
                                    stride=stride, padding=padding, dilation=dilation))
    out = jax.block_until_ready(fwd(x, w_real, b_real, w_imag, b_imag))

    ref = reference_forward(x, w_real, b_real, w_imag, b_imag,
                            stride=stride, padding=padding, dilation=dilation)
    assert out.shape == ref.shape, (out.shape, ref.shape)
    assert jnp.allclose(out, ref, atol=1e-3, rtol=1e-3), float(jnp.max(jnp.abs(out - ref)))

    print("KERNEL_OK")
</pallas_src>

<mosaic_0001>
module attributes {stable_mosaic.version = 11 : i64} {
  func.func @_complex_conv_kernel(%arg0: i32, %arg1: memref<8x512xf32, #tpu.memory_space<vmem>>, %arg2: memref<8x128xf32, #tpu.memory_space<vmem>>, %arg3: memref<16x48xf32, #tpu.memory_space<vmem>>, %arg4: memref<16x1xf32, #tpu.memory_space<vmem>>, %arg5: memref<16x512xf32, #tpu.memory_space<vmem>>) attributes {dimension_semantics = [#tpu.dimension_semantics<parallel>], iteration_bounds = array<i64: 2>, scalar_prefetch = 0 : i64, scratch_operands = 0 : i64, tpu.core_type = #tpu.core_type<tc>, window_params = [{transform_indices = @transform_0, window_bounds = array<i64: 8, 512>}, {transform_indices = @transform_1, window_bounds = array<i64: 8, 128>}, {pipeline_mode = #tpu.pipeline_mode<synchronous>, transform_indices = @transform_2, window_bounds = array<i64: 16, 48>}, {pipeline_mode = #tpu.pipeline_mode<synchronous>, transform_indices = @transform_3, window_bounds = array<i64: 16, 1>}, {transform_indices = @transform_4, window_bounds = array<i64: 16, 512>}]} {
    %c0 = arith.constant 0 : index
    %c0_0 = arith.constant 0 : index
    %0 = vector.load %arg1[%c0, %c0_0] : memref<8x512xf32, #tpu.memory_space<vmem>>, vector<8x512xf32>
    %c0_1 = arith.constant 0 : index
    %c0_2 = arith.constant 0 : index
    %1 = vector.load %arg2[%c0_1, %c0_2] : memref<8x128xf32, #tpu.memory_space<vmem>>, vector<8x128xf32>
    %2 = tpu.concatenate %0, %1 in 1 : vector<8x512xf32>, vector<8x128xf32> -> vector<8x640xf32>
    %3 = vector.extract_strided_slice %2 {offsets = [0, 0], sizes = [8, 512], strides = [1, 1]} : vector<8x640xf32> to vector<8x512xf32>
    %4 = vector.extract_strided_slice %2 {offsets = [0, 1], sizes = [8, 512], strides = [1, 1]} : vector<8x640xf32> to vector<8x512xf32>
    %5 = vector.extract_strided_slice %2 {offsets = [0, 18], sizes = [8, 512], strides = [1, 1]} : vector<8x640xf32> to vector<8x512xf32>
    %6 = vector.extract_strided_slice %2 {offsets = [0, 19], sizes = [8, 512], strides = [1, 1]} : vector<8x640xf32> to vector<8x512xf32>
    %7 = vector.extract_strided_slice %2 {offsets = [0, 36], sizes = [8, 512], strides = [1, 1]} : vector<8x640xf32> to vector<8x512xf32>
    %8 = vector.extract_strided_slice %2 {offsets = [0, 37], sizes = [8, 512], strides = [1, 1]} : vector<8x640xf32> to vector<8x512xf32>
    %9 = tpu.concatenate %3, %4, %5, %6, %7, %8 in 0 : vector<8x512xf32>, vector<8x512xf32>, vector<8x512xf32>, vector<8x512xf32>, vector<8x512xf32>, vector<8x512xf32> -> vector<48x512xf32>
    %c0_3 = arith.constant 0 : index
    %c0_4 = arith.constant 0 : index
    %10 = vector.load %arg3[%c0_3, %c0_4] : memref<16x48xf32, #tpu.memory_space<vmem>>, vector<16x48xf32>
    %cst = arith.constant dense<0.000000e+00> : vector<16x512xf32>
    %11 = tpu.matmul %10, %9, %cst {dimension_numbers = #tpu.dot_dimension_numbers<[1], [0], [0], [1], [0, 0, 1, 1], [], []>} : vector<16x48xf32>, vector<48x512xf32>, vector<16x512xf32> -> vector<16x512xf32>
    %c0_5 = arith.constant 0 : index
    %c0_6 = arith.constant 0 : index
    %12 = vector.load %arg4[%c0_5, %c0_6] : memref<16x1xf32, #tpu.memory_space<vmem>>, vector<16x1xf32>
    %13 = vector.broadcast %12 : vector<16x1xf32> to vector<16x512xf32>
    %14 = arith.addf %11, %13 : vector<16x512xf32>
    %c0_7 = arith.constant 0 : index
    %c0_8 = arith.constant 0 : index
    %15 = vector.load %arg5[%c0_7, %c0_8] : memref<16x512xf32, #tpu.memory_space<vmem>>, vector<16x512xf32>
    tpu.vector_store %arg5[%c0_7, %c0_8], %14 {strides = array<i32>} : memref<16x512xf32, #tpu.memory_space<vmem>>, vector<16x512xf32>,
    return
  }
  func.func @transform_0(%arg0: i32) -> (i32, i32) {
    %c0_i32 = arith.constant 0 : i32
    %c0_i32_0 = arith.constant 0 : i32
    return %c0_i32, %arg0 : i32, i32
  }
  func.func @transform_1(%arg0: i32) -> (i32, i32) {
    %c1_i32 = arith.constant 1 : i32
    %0 = arith.addi %arg0, %c1_i32 : i32
    %c4_i32 = arith.constant 4 : i32
    %1 = arith.muli %0, %c4_i32 : i32
    %c0_i32 = arith.constant 0 : i32
    %c0_i32_0 = arith.constant 0 : i32
    return %c0_i32, %1 : i32, i32
  }
  func.func @transform_2(%arg0: i32) -> (i32, i32) {
    %c0_i32 = arith.constant 0 : i32
    %c0_i32_0 = arith.constant 0 : i32
    %c0_i32_1 = arith.constant 0 : i32
    return %c0_i32, %c0_i32_0 : i32, i32
  }
  func.func @transform_3(%arg0: i32) -> (i32, i32) {
    %c0_i32 = arith.constant 0 : i32
    %c0_i32_0 = arith.constant 0 : i32
    %c0_i32_1 = arith.constant 0 : i32
    return %c0_i32, %c0_i32_0 : i32, i32
  }
  func.func @transform_4(%arg0: i32) -> (i32, i32) {
    %c0_i32 = arith.constant 0 : i32
    %c0_i32_0 = arith.constant 0 : i32
    return %c0_i32, %arg0 : i32, i32
  }
}

</mosaic_0001>

<llo_original>
// kernel: neg.1
$region0: #{neg.1}
  #allocation0 [shape = 's32[1]{0}', space=sflag, size = 0x4, scoped, tag = 'scoped memory for neg.1']
  %s0 = inlined_call_operand.vmem [shape: f32[8,4,3,2], index: 0, kind: input, shape index: {}]
  %s1 = inlined_call_operand.vmem [shape: f32[8,4,3,2], index: 1, kind: output, shape index: {}]
  %v2 = vld [vmem:[%s0] sm:$0x3]
  %3 = xla_tuple %v2
  %4 = xla_tuple %3
  %v5 = vxor.u32 %v2, 2147483648
  %6 = xla_tuple %v5
  %7 = vst [vmem:[%s1] sm:$0x3] %v5
  %s8 = scalar_lea.vmem %s0, 6
  %v9 = vld [vmem:[%s8] sm:$0x3]
  %10 = xla_tuple %v9
  %11 = xla_tuple %10
  %v12 = vxor.u32 %v9, 2147483648
  %13 = xla_tuple %v12
  %s14 = scalar_lea.vmem %s1, 6
  %15 = vst [vmem:[%s14] sm:$0x3] %v12
  %s16 = scalar_lea.vmem %s0, 12
  %v17 = vld [vmem:[%s16] sm:$0x3]
  %18 = xla_tuple %v17
  %19 = xla_tuple %18
  %v20 = vxor.u32 %v17, 2147483648
  %21 = xla_tuple %v20
  %s22 = scalar_lea.vmem %s1, 12
  %23 = vst [vmem:[%s22] sm:$0x3] %v20
  %s24 = scalar_lea.vmem %s0, 18
  %v25 = vld [vmem:[%s24] sm:$0x3]
  %26 = xla_tuple %v25
  %27 = xla_tuple %26
  %v28 = vxor.u32 %v25, 2147483648
  %29 = xla_tuple %v28
  %s30 = scalar_lea.vmem %s1, 18
  %31 = vst [vmem:[%s30] sm:$0x3] %v28
  %s32 = scalar_lea.vmem %s0, 2
  %v33 = vld [vmem:[%s32] sm:$0x3]
  %34 = xla_tuple %v33
  %35 = xla_tuple %34
  %v36 = vxor.u32 %v33, 2147483648
  %37 = xla_tuple %v36
  %s38 = scalar_lea.vmem %s1, 2
  %39 = vst [vmem:[%s38] sm:$0x3] %v36
  %s40 = scalar_lea.vmem %s0, 8
  %v41 = vld [vmem:[%s40] sm:$0x3]
  %42 = xla_tuple %v41
  %43 = xla_tuple %42
  %v44 = vxor.u32 %v41, 2147483648
  %45 = xla_tuple %v44
  %s46 = scalar_lea.vmem %s1, 8
  %47 = vst [vmem:[%s46] sm:$0x3] %v44
  %s48 = scalar_lea.vmem %s0, 14
  %v49 = vld [vmem:[%s48] sm:$0x3]
  %50 = xla_tuple %v49
  %51 = xla_tuple %50
  %v52 = vxor.u32 %v49, 2147483648
  %53 = xla_tuple %v52
  %s54 = scalar_lea.vmem %s1, 14
  %55 = vst [vmem:[%s54] sm:$0x3] %v52
  %s56 = scalar_lea.vmem %s0, 20
  %v57 = vld [vmem:[%s56] sm:$0x3]
  %58 = xla_tuple %v57
  %59 = xla_tuple %58
  %v60 = vxor.u32 %v57, 2147483648
  %61 = xla_tuple %v60
  %s62 = scalar_lea.vmem %s1, 20
  %63 = vst [vmem:[%s62] sm:$0x3] %v60
  %s64 = scalar_lea.vmem %s0, 4
  %v65 = vld [vmem:[%s64] sm:$0x3]
  %66 = xla_tuple %v65
  %67 = xla_tuple %66
  %v68 = vxor.u32 %v65, 2147483648
  %69 = xla_tuple %v68
  %s70 = scalar_lea.vmem %s1, 4
  %71 = vst [vmem:[%s70] sm:$0x3] %v68
  %s72 = scalar_lea.vmem %s0, 10
  %v73 = vld [vmem:[%s72] sm:$0x3]
  %74 = xla_tuple %v73
  %75 = xla_tuple %74
  %v76 = vxor.u32 %v73, 2147483648
  %77 = xla_tuple %v76
  %s78 = scalar_lea.vmem %s1, 10
  %79 = vst [vmem:[%s78] sm:$0x3] %v76
  %s80 = scalar_lea.vmem %s0, 16
  %v81 = vld [vmem:[%s80] sm:$0x3]
  %82 = xla_tuple %v81
  %83 = xla_tuple %82
  %v84 = vxor.u32 %v81, 2147483648
  %85 = xla_tuple %v84
  %s86 = scalar_lea.vmem %s1, 16
  %87 = vst [vmem:[%s86] sm:$0x3] %v84
  %s88 = scalar_lea.vmem %s0, 22
  %v89 = vld [vmem:[%s88] sm:$0x3]
  %90 = xla_tuple %v89
  %91 = xla_tuple %90
  %v92 = vxor.u32 %v89, 2147483648
  %93 = xla_tuple %v92
  %s94 = scalar_lea.vmem %s1, 22
  %95 = vst [vmem:[%s94] sm:$0x3] %v92

// kernel: complex_conv2d_encoder.1
$region0: #{complex_conv2d_encoder.1}
  #allocation0 [shape = 'u32[]', space=smem, size = 0x4, offset = 0x4, fixed_abs, tag = 'smem constant byte address 0x4 - core index']
  #allocation1 [shape = 'u32[72,128]{1,0:T(1,128)}', space=vmem, size = 0x9000, scoped, tag = 'internal scratch']
  %s0 = inlined_call_operand.vmem [shape: f32[8,1152], index: 0, kind: input, shape index: {}, may-alias: {0,1}]
  %s1 = inlined_call_operand.vmem [shape: f32[8,1152], index: 1, kind: input, shape index: {}, may-alias: {0,1}]
  %s2 = inlined_call_operand.vmem [shape: f32[16,48], index: 2, kind: input, shape index: {}]
  %s3 = inlined_call_operand.vmem [shape: f32[16,1], index: 3, kind: input, shape index: {}]
  %s4 = inlined_call_operand.vmem [shape: f32[16,1024], index: 4, kind: output, shape index: {}]
  %s5 = sld [smem:[#allocation0]]
  $region68: #{complex_conv2d_encoder.1} parent=0
    _
  %s7 = ssub.s32 1, %s5
  %s8 = scalar_select 0, %s7, %s5
  $region1: #{complex_conv2d_encoder.1} parent=0
    #allocation2 [shape = 'u8[65536]{0}', space=vmem, size = 0x10000, scoped, tag = 'output window, operand 0']
    loop: start=0, step=1, limit=4
    $region2: #{complex_conv2d_encoder.1} parent=1 // loop_pre_header
      _
    $region3: #{complex_conv2d_encoder.1} parent=1 // loop_header
      %s10 = sphi 0, %s14
      %p11 = scmp.ge.s32.totalorder %s10, 4
      %s20 = sphi 0, %s22
      %s23 = sphi 0, %s20
      %s24 = sphi 0, %s23
      %s40 = sphi 0, %s24
      %s50 = sphi 0, %s52
      %s53 = sphi 0, %s50
      %s54 = sphi 0, %s53
      %s70 = sphi 0, %s54
      %s74 = sphi 0, %s74
      %s76 = sphi 0, %s74
      %s77 = sphi 0, %s76
      %s91 = sphi 0, %s77
      %s95 = sphi 0, %s95
      %s97 = sphi 0, %s95
      %s98 = sphi 0, %s97
      %s112 = sphi 0, %s98
      %s118 = sphi 0, %s120
      %s121 = sphi 0, %s118
      %s122 = sphi 0, %s121
      %s138 = sphi 0, %s122
    $region4: #{complex_conv2d_encoder.1} parent=1 // loop_header_branch
      %13 = sbr.rel (%p11) target = $region8
    $region5: #{complex_conv2d_encoder.1} parent=1 // loop_body
      %s15 = ssub.s32 %s10, 1
      %s16 = ssub.s32 %s10, 2
      %s17 = sadd.s32 %s10, 1
      %s18 = ssub.s32 %s10, %s17
      %p19 = scmp.eq.s32.totalorder %s18, 0
      %s21 = sadd.s32 %s20, 1
      %s22 = scalar_select %p19, %s20, %s21
      %p25 = pneg %p19
      %p26 = scmp.eq.s32.totalorder %s10, 1
      %p27 = por %p25, %p26
      %p28 = scmp.ne.s32.totalorder %s20, %s23
      %p29 = scmp.eq.s32.totalorder %s10, 0
      %p30 = por %p28, %p29
      %p31 = scmp.ne.s32.totalorder %s20, %s23
      %p32 = scmp.eq.s32.totalorder %s15, 1
      %p33 = por %p31, %p32
      %p34 = scmp.ne.s32.totalorder %s23, %s24
      %p35 = scmp.eq.s32.totalorder %s15, 0
      %p36 = por %p34, %p35
      %p37 = scmp.ne.s32.totalorder %s23, %s24
      %p38 = scmp.eq.s32.totalorder %s16, 1
      %p39 = por %p37, %p38
      %p41 = scmp.ne.s32.totalorder %s24, %s40
      %p42 = scmp.eq.s32.totalorder %s16, 0
      %p43 = por %p41, %p42
      %s44 = sadd.s32 %s10, 1
      %s45 = smul.u32 %s44, 4
      %s46 = sadd.s32 %s17, 1
      %s47 = smul.u32 %s46, 4
      %s48 = ssub.s32 %s45, %s47
      %p49 = scmp.eq.s32.totalorder %s48, 0
      %s51 = sadd.s32 %s50, 1
      %s52 = scalar_select %p49, %s50, %s51
      %p55 = pneg %p49
      %p56 = scmp.eq.s32.totalorder %s10, 1
      %p57 = por %p55, %p56
      %p58 = scmp.ne.s32.totalorder %s50, %s53
      %p59 = scmp.eq.s32.totalorder %s10, 0
      %p60 = por %p58, %p59
      %p61 = scmp.ne.s32.totalorder %s50, %s53
      %p62 = scmp.eq.s32.totalorder %s15, 1
      %p63 = por %p61, %p62
      %p64 = scmp.ne.s32.totalorder %s53, %s54
      %p65 = scmp.eq.s32.totalorder %s15, 0
      %p66 = por %p64, %p65
      %p67 = scmp.ne.s32.totalorder %s53, %s54
      %p68 = scmp.eq.s32.totalorder %s16, 1
      %p69 = por %p67, %p68
      %p71 = scmp.ne.s32.totalorder %s54, %s70
      %p72 = scmp.eq.s32.totalorder %s16, 0
      %p73 = por %p71, %p72
      %s75 = sadd.s32 %s74, 1
      %p78 = scmp.eq.s32.totalorder %s10, 1
      %p79 = scmp.ne.s32.totalorder %s74, %s76
      %p80 = scmp.eq.s32.totalorder %s10, 0
      %p81 = por %p79, %p80
      %p82 = scmp.ne.s32.totalorder %s74, %s76
      %p83 = scmp.eq.s32.totalorder %s15, 1
      %p84 = por %p82, %p83
      %p85 = scmp.ne.s32.totalorder %s76, %s77
      %p86 = scmp.eq.s32.totalorder %s15, 0
      %p87 = por %p85, %p86
      %p88 = scmp.ne.s32.totalorder %s76, %s77
      %p89 = scmp.eq.s32.totalorder %s16, 1
      %p90 = por %p88, %p89
      %p92 = scmp.ne.s32.totalorder %s77, %s91
      %p93 = scmp.eq.s32.totalorder %s16, 0
      %p94 = por %p92, %p93
      %s96 = sadd.s32 %s95, 1
      %p99 = scmp.eq.s32.totalorder %s10, 1
      %p100 = scmp.ne.s32.totalorder %s95, %s97
      %p101 = scmp.eq.s32.totalorder %s10, 0
      %p102 = por %p100, %p101
      %p103 = scmp.ne.s32.totalorder %s95, %s97
      %p104 = scmp.eq.s32.totalorder %s15, 1
      %p105 = por %p103, %p104
      %p106 = scmp.ne.s32.totalorder %s97, %s98
      %p107 = scmp.eq.s32.totalorder %s15, 0
      %p108 = por %p106, %p107
      %p109 = scmp.ne.s32.totalorder %s97, %s98
      %p110 = scmp.eq.s32.totalorder %s16, 1
      %p111 = por %p109, %p110
      %p113 = scmp.ne.s32.totalorder %s98, %s112
      %p114 = scmp.eq.s32.totalorder %s16, 0
      %p115 = por %p113, %p114
      %s116 = ssub.s32 %s10, %s17
      %p117 = scmp.eq.s32.totalorder %s116, 0
      %s119 = sadd.s32 %s118, 1
      %s120 = scalar_select %p117, %s118, %s119
      %p123 = pneg %p117
      %p124 = scmp.eq.s32.totalorder %s10, 1
      %p125 = por %p123, %p124
      %p126 = scmp.ne.s32.totalorder %s118, %s121
      %p127 = scmp.eq.s32.totalorder %s10, 0
      %p128 = por %p126, %p127
      %p129 = scmp.ne.s32.totalorder %s118, %s121
      %p130 = scmp.eq.s32.totalorder %s15, 1
      %p131 = por %p129, %p130
      %p132 = scmp.ne.s32.totalorder %s121, %s122
      %p133 = scmp.eq.s32.totalorder %s15, 0
      %p134 = por %p132, %p133
      %p135 = scmp.ne.s32.totalorder %s121, %s122
      %p136 = scmp.eq.s32.totalorder %s16, 1
      %p137 = por %p135, %p136
      %p139 = scmp.ne.s32.totalorder %s122, %s138
      %p140 = scmp.eq.s32.totalorder %s16, 0
      %p141 = por %p139, %p140
      %p142 = scmp.le.s32.totalorder 1, %s10
      %p143 = scmp.lt.s32.totalorder %s10, 3
      %p144 = pnand %p142, %p143
      %p145 = pneg %p144
      // Predicated region
      $region9: #{complex_conv2d_encoder.1} parent=5 // pred_check
        _
      $region10: #{complex_conv2d_encoder.1} parent=5 // pred_check_branch
        %147 = sbr.rel (%p144) target = $region12
      $region11: #{complex_conv2d_encoder.1} parent=5 // pred_region
        %s148 = ssub.s32 %s10, 1
        // Predicated region
        $region13: #{complex_conv2d_encoder.1} parent=11 // pred_check
          %p149 = pneg %p87
        $region14: #{complex_conv2d_encoder.1} parent=11 // pred_check_branch
          %151 = sbr.rel (%p149) target = $region16
        $region15: #{complex_conv2d_encoder.1} parent=11 // pred_region
          _
        $region16: #{complex_conv2d_encoder.1} parent=11 // pred_fallthru
          _
        // Predicated region
        $region17: #{complex_conv2d_encoder.1} parent=11 // pred_check
          %p152 = pneg %p108
        $region18: #{complex_conv2d_encoder.1} parent=11 // pred_check_branch
          %154 = sbr.rel (%p152) target = $region20
        $region19: #{complex_conv2d_encoder.1} parent=11 // pred_region
          _
        $region20: #{complex_conv2d_encoder.1} parent=11 // pred_fallthru
          _
      $region12: #{complex_conv2d_encoder.1} parent=5 // pred_fallthru
        _
      %p155 = scmp.lt.s32.totalorder %s10, 2
      // Predicated region
      $region21: #{complex_conv2d_encoder.1} parent=5 // pred_check
        %p156 = pneg %p155
      $region22: #{complex_conv2d_encoder.1} parent=5 // pred_check_branch
        %158 = sbr.rel (%p156) target = $region24
      $region23: #{complex_conv2d_encoder.1} parent=5 // pred_region
        // Predicated region
        $region25: #{complex_conv2d_encoder.1} parent=23 // pred_check
          %p159 = pneg %p30
        $region26: #{complex_conv2d_encoder.1} parent=23 // pred_check_branch
          %161 = sbr.rel (%p159) target = $region28
        $region27: #{complex_conv2d_encoder.1} parent=23 // pred_region
          %s162 = smul.u32 4, %s10
          %s163 = ssub.s32 9, %s162
          %p164 = scmp.lt.s32.totalorder %s163, 4
          %s165 = scalar_select %p164, %s163, 4
          %s166 = smul.u32 8, %s165
          %p167 = scmp.lt.s32.totalorder %s162, 8
          %s168 = scalar_select %p167, %s162, 8
          %s169 = smul.addr %s168, 8
          %s170 = scalar_lea.vmem %s0, %s169
          %s171 = smul.u32 4, %s10
          %s172 = ssub.s32 9, %s171
          %p173 = scmp.lt.s32.totalorder %s172, 4
          %s174 = scalar_select %p173, %s172, 4
          %s175 = smul.u32 8, %s174
        $region28: #{complex_conv2d_encoder.1} parent=23 // pred_fallthru
          _
        // Predicated region
        $region29: #{complex_conv2d_encoder.1} parent=23 // pred_check
          %p176 = pneg %p60
        $region30: #{complex_conv2d_encoder.1} parent=23 // pred_check_branch
          %178 = sbr.rel (%p176) target = $region32
        $region31: #{complex_conv2d_encoder.1} parent=23 // pred_region
          %s179 = sadd.s32 %s10, 1
          %s180 = smul.u32 %s179, 4
          %p181 = scmp.lt.s32.totalorder %s180, 8
          %s182 = scalar_select %p181, %s180, 8
          %s183 = smul.addr %s182, 8
          %s184 = scalar_lea.vmem %s1, %s183
          %s185 = sadd.s32 %s10, 1
          %s186 = smul.u32 %s185, 4
        $region32: #{complex_conv2d_encoder.1} parent=23 // pred_fallthru
          _
      $region24: #{complex_conv2d_encoder.1} parent=5 // pred_fallthru
        _
      %p187 = scmp.le.s32.totalorder 1, %s10
      %p188 = scmp.lt.s32.totalorder %s10, 3
      %p189 = pnand %p187, %p188
      %p190 = pneg %p189
      // Predicated region
      $region33: #{complex_conv2d_encoder.1} parent=5 // pred_check
        _
      $region34: #{complex_conv2d_encoder.1} parent=5 // pred_check_branch
        %192 = sbr.rel (%p189) target = $region36
      $region35: #{complex_conv2d_encoder.1} parent=5 // pred_region
        %s193 = ssub.s32 %s10, 1
        %s194 = smul.u32 4, %s15
        %s195 = ssub.s32 9, %s194
        %p196 = scmp.lt.s32.totalorder %s195, 4
        %s197 = scalar_select %p196, %s195, 4
        %s198 = smul.u32 8, %s197
        %p199 = scmp.lt.s32.totalorder %s194, 8
        %s200 = scalar_select %p199, %s194, 8
        %s201 = smul.addr %s200, 8
        %s202 = scalar_lea.vmem %s0, %s201
        %p203 = pneg %p36
        %p204 = pneg %p33
        %s205 = sadd.s32 %s15, 1
        %s206 = smul.u32 %s205, 4
        %p207 = scmp.lt.s32.totalorder %s206, 8
        %s208 = scalar_select %p207, %s206, 8
        %s209 = smul.addr %s208, 8
        %s210 = scalar_lea.vmem %s1, %s209
        %p211 = pneg %p66
        %p212 = pneg %p63
        %p213 = pneg %p87
        %p214 = pneg %p84
        %p215 = pneg %p108
        %p216 = pneg %p105
        %p217 = pneg %p134
        %p218 = pneg %p131
        %s219 = sand.u32 %s121, 1
        %s220 = sand.u32 %s121, 1
        %s221 = smul.addr %s220, 64
        %s222 = scalar_lea.vmem [#allocation2], %s221
        %s223 = smul.u32 4, %s15
        %s224 = ssub.s32 9, %s223
        %p225 = scmp.lt.s32.totalorder %s224, 4
        %s226 = scalar_select %p225, %s224, 4
        %s227 = smul.u32 8, %s226
        %p228 = scmp.lt.s32.totalorder %s223, 8
        %s229 = scalar_select %p228, %s223, 8
        %s230 = smul.addr %s229, 8
        %s231 = scalar_lea.vmem %s0, %s230
        %s232 = smul.u32 4, %s15
        %s233 = ssub.s32 9, %s232
        %p234 = scmp.lt.s32.totalorder %s233, 4
        %s235 = scalar_select %p234, %s233, 4
        %s236 = smul.u32 8, %s235
        %s237 = sadd.s32 %s15, 1
        %s238 = smul.u32 %s237, 4
        %p239 = scmp.lt.s32.totalorder %s238, 8
        %s240 = scalar_select %p239, %s238, 8
        %s241 = smul.addr %s240, 8
        %s242 = scalar_lea.vmem %s1, %s241
        %s243 = sadd.s32 %s15, 1
        %s244 = smul.u32 %s243, 4
        %s245 = smul.u32 4, %s15
        %v246 = vld [vmem:[%s231] sm:$0xff]
        %v247 = vld [vmem:[%s231 + $0x8] sm:$0xff]
        %v248 = vld [vmem:[%s231 + $0x10] sm:$0xff]
        %v249 = vld [vmem:[%s231 + $0x18] sm:$0xff]
        %v250 = vld [vmem:[%s242] sm:$0xff]
        %256 = vrot.lane.b32.xlu0 %v246, 127
        %v257 = vpop.permute.xlu0 %256
        %258 = vrot.lane.b32.xlu0 %v247, 127
        %v259 = vpop.permute.xlu0 %258
        %260 = vrot.lane.b32.xlu0 %v248, 127
        %v261 = vpop.permute.xlu0 %260
        %262 = vrot.lane.b32.xlu0 %v249, 127
        %v263 = vpop.permute.xlu0 %262
        %264 = vrot.lane.b32.xlu0 %v250, 127
        %v265 = vpop.permute.xlu0 %264
        %vm266 = vcmask 1039360
        %v267 = vsel %vm266, %v257, %v259
        %v268 = vsel %vm266, %v259, %v261
        %v269 = vsel %vm266, %v261, %v263
        %v270 = vsel %vm266, %v263, %v265
        %275 = vrot.lane.b32.xlu0 %v246, 110
        %v276 = vpop.permute.xlu0 %275
        %277 = vrot.lane.b32.xlu0 %v247, 110
        %v278 = vpop.permute.xlu0 %277
        %279 = vrot.lane.b32.xlu0 %v248, 110
        %v280 = vpop.permute.xlu0 %279
        %281 = vrot.lane.b32.xlu0 %v249, 110
        %v282 = vpop.permute.xlu0 %281
        %283 = vrot.lane.b32.xlu0 %v250, 110
        %v284 = vpop.permute.xlu0 %283
        %vm285 = vcmask 900096
        %v286 = vsel %vm285, %v276, %v278
        %v287 = vsel %vm285, %v278, %v280
        %v288 = vsel %vm285, %v280, %v282
        %v289 = vsel %vm285, %v282, %v284
        %294 = vrot.lane.b32.xlu0 %v246, 109
        %v295 = vpop.permute.xlu0 %294
        %296 = vrot.lane.b32.xlu0 %v247, 109
        %v297 = vpop.permute.xlu0 %296
        %298 = vrot.lane.b32.xlu0 %v248, 109
        %v299 = vpop.permute.xlu0 %298
        %300 = vrot.lane.b32.xlu0 %v249, 109
        %v301 = vpop.permute.xlu0 %300
        %302 = vrot.lane.b32.xlu0 %v250, 109
        %v303 = vpop.permute.xlu0 %302
        %vm304 = vcmask 891904
        %v305 = vsel %vm304, %v295, %v297
        %v306 = vsel %vm304, %v297, %v299
        %v307 = vsel %vm304, %v299, %v301
        %v308 = vsel %vm304, %v301, %v303
        %313 = vrot.lane.b32.xlu0 %v246, 92
        %v314 = vpop.permute.xlu0 %313
        %315 = vrot.lane.b32.xlu0 %v247, 92
        %v316 = vpop.permute.xlu0 %315
        %317 = vrot.lane.b32.xlu0 %v248, 92
        %v318 = vpop.permute.xlu0 %317
        %319 = vrot.lane.b32.xlu0 %v249, 92
        %v320 = vpop.permute.xlu0 %319
        %321 = vrot.lane.b32.xlu0 %v250, 92
        %v322 = vpop.permute.xlu0 %321
        %vm323 = vcmask 752640
        %v324 = vsel %vm323, %v314, %v316
        %v325 = vsel %vm323, %v316, %v318
        %v326 = vsel %vm323, %v318, %v320
        %v327 = vsel %vm323, %v320, %v322
        %332 = vrot.lane.b32.xlu0 %v246, 91
        %v333 = vpop.permute.xlu0 %332
        %334 = vrot.lane.b32.xlu0 %v247, 91
        %v335 = vpop.permute.xlu0 %334
        %336 = vrot.lane.b32.xlu0 %v248, 91
        %v337 = vpop.permute.xlu0 %336
        %338 = vrot.lane.b32.xlu0 %v249, 91
        %v339 = vpop.permute.xlu0 %338
        %340 = vrot.lane.b32.xlu0 %v250, 91
        %v341 = vpop.permute.xlu0 %340
        %vm342 = vcmask 744448
        %v343 = vsel %vm342, %v333, %v335
        %v344 = vsel %vm342, %v335, %v337
        %v345 = vsel %vm342, %v337, %v339
        %v346 = vsel %vm342, %v339, %v341
        %v351 = vld [vmem:[%s2] sm:$0xff]
        %v352 = vld [vmem:[%s2 + $0x8] sm:$0xff]
        %v353 = vld [vmem:[%s3] sm:$0xff]
        %v354 = vld [vmem:[%s3 + $0x8] sm:$0xff]
        %356 = vset.pattern.permute.xlu0 0
        %357 = vperm.xlu0 %356, %v353
        %v358 = vpop.permute.xlu0 %357
        %361 = vset.pattern.permute.xlu0 0
        %362 = vperm.xlu0 %361, %v354
        %v363 = vpop.permute.xlu0 %362
        %vm365 = vcmask 392192
        %v367 = vsel %vm365, %v351, 0
        %v370 = vsel %vm365, %v352, 0
        %372 = vmatpush.msra.mxu0 0.0
        %373 = vmatpush.msra.mxu0 0.0
        %374 = vmatpush.msra.mxu0 0.0
        %375 = vmatpush.msra.mxu0 0.0
        %376 = vmatpush.msra.mxu0 0.0
        %377 = vmatpush.msra.mxu0 0.0
        %378 = vmatpush.msra.mxu0 0.0
        %379 = vmatpush.msra.mxu0 0.0
        %380 = vmatpush.msra.mxu0 0.0
        %381 = vmatpush.msra.mxu0 0.0
        %382 = vmatpush.msra.mxu0 %v343
        %383 = vmatpush.msra.mxu0 %v324
        %384 = vmatpush.msra.mxu0 %v305
        %385 = vmatpush.msra.mxu0 %v286
        %386 = vmatpush.msra.mxu0 %v267
        %387 = vmatpush.msra.mxu0 %v246
        %388 = vmatmul.f32.gmra.mxu0 %v367
        %v389 = vpop.f32.mrf.mxu0
        %v390 = vadd.f32 %v358, %v389
        %391 = vmatmul.f32.gmra.mxu0 %v370
        %v392 = vpop.f32.mrf.mxu0
        %v393 = vadd.f32 %v363, %v392
        %394 = vdwg.mxu0
        %395 = vmatpush.msra.mxu0 0.0
        %396 = vmatpush.msra.mxu0 0.0
        %397 = vmatpush.msra.mxu0 0.0
        %398 = vmatpush.msra.mxu0 0.0
        %399 = vmatpush.msra.mxu0 0.0
        %400 = vmatpush.msra.mxu0 0.0
        %401 = vmatpush.msra.mxu0 0.0
        %402 = vmatpush.msra.mxu0 0.0
        %403 = vmatpush.msra.mxu0 0.0
        %404 = vmatpush.msra.mxu0 0.0
        %405 = vmatpush.msra.mxu0 %v344
        %406 = vmatpush.msra.mxu0 %v325
        %407 = vmatpush.msra.mxu0 %v306
        %408 = vmatpush.msra.mxu0 %v287
        %409 = vmatpush.msra.mxu0 %v268
        %410 = vmatpush.msra.mxu0 %v247
        %411 = vmatmul.f32.gmra.mxu0 %v367
        %v412 = vpop.f32.mrf.mxu0
        %v413 = vadd.f32 %v358, %v412
        %414 = vmatmul.f32.gmra.mxu0 %v370
        %v415 = vpop.f32.mrf.mxu0
        %v416 = vadd.f32 %v363, %v415
        %417 = vdwg.mxu0
        %418 = vmatpush.msra.mxu0 0.0
        %419 = vmatpush.msra.mxu0 0.0
        %420 = vmatpush.msra.mxu0 0.0
        %421 = vmatpush.msra.mxu0 0.0
        %422 = vmatpush.msra.mxu0 0.0
        %423 = vmatpush.msra.mxu0 0.0
        %424 = vmatpush.msra.mxu0 0.0
        %425 = vmatpush.msra.mxu0 0.0
        %426 = vmatpush.msra.mxu0 0.0
        %427 = vmatpush.msra.mxu0 0.0
        %428 = vmatpush.msra.mxu0 %v345
        %429 = vmatpush.msra.mxu0 %v326
        %430 = vmatpush.msra.mxu0 %v307
        %431 = vmatpush.msra.mxu0 %v288
        %432 = vmatpush.msra.mxu0 %v269
        %433 = vmatpush.msra.mxu0 %v248
        %434 = vmatmul.f32.gmra.mxu0 %v367
        %v435 = vpop.f32.mrf.mxu0
        %v436 = vadd.f32 %v358, %v435
        %437 = vmatmul.f32.gmra.mxu0 %v370
        %v438 = vpop.f32.mrf.mxu0
        %v439 = vadd.f32 %v363, %v438
        %440 = vdwg.mxu0
        %441 = vmatpush.msra.mxu0 0.0
        %442 = vmatpush.msra.mxu0 0.0
        %443 = vmatpush.msra.mxu0 0.0
        %444 = vmatpush.msra.mxu0 0.0
        %445 = vmatpush.msra.mxu0 0.0
        %446 = vmatpush.msra.mxu0 0.0
        %447 = vmatpush.msra.mxu0 0.0
        %448 = vmatpush.msra.mxu0 0.0
        %449 = vmatpush.msra.mxu0 0.0
        %450 = vmatpush.msra.mxu0 0.0
        %451 = vmatpush.msra.mxu0 %v346
        %452 = vmatpush.msra.mxu0 %v327
        %453 = vmatpush.msra.mxu0 %v308
        %454 = vmatpush.msra.mxu0 %v289
        %455 = vmatpush.msra.mxu0 %v270
        %456 = vmatpush.msra.mxu0 %v249
        %457 = vmatmul.f32.gmra.mxu0 %v367
        %v458 = vpop.f32.mrf.mxu0
        %v459 = vadd.f32 %v358, %v458
        %460 = vmatmul.f32.gmra.mxu0 %v370
        %v461 = vpop.f32.mrf.mxu0
        %v462 = vadd.f32 %v363, %v461
        %463 = vdwg.mxu0
        %464 = vst [vmem:[%s222] sm:$0xff] %v390
        %465 = vst [vmem:[%s222 + $0x8] sm:$0xff] %v413
        %466 = vst [vmem:[%s222 + $0x10] sm:$0xff] %v436
        %467 = vst [vmem:[%s222 + $0x18] sm:$0xff] %v459
        %468 = vst [vmem:[%s222 + $0x20] sm:$0xff] %v393
        %469 = vst [vmem:[%s222 + $0x28] sm:$0xff] %v416
        %470 = vst [vmem:[%s222 + $0x30] sm:$0xff] %v439
        %471 = vst [vmem:[%s222 + $0x38] sm:$0xff] %v462
        %s472 = sand.u32 %s121, 1
        %s473 = sand.u32 %s121, 1
        %s474 = smul.addr %s473, 64
        %s475 = scalar_lea.vmem [#allocation2], %s474
        // Predicated region
        $region37: #{complex_conv2d_encoder.1} parent=35 // pred_check
          %p476 = pneg %p131
        $region38: #{complex_conv2d_encoder.1} parent=35 // pred_check_branch
          %478 = sbr.rel (%p476) target = $region40
        $region39: #{complex_conv2d_encoder.1} parent=35 // pred_region
          %s479 = smul.u32 4, %s15
          %s480 = smul.addr %s479, 8
          %s481 = scalar_lea.vmem %s4, %s480
          // Predicated region
          $region41: #{complex_conv2d_encoder.1} parent=39 // pred_check
            _
          $region42: #{complex_conv2d_encoder.1} parent=39 // pred_check_branch
            %483 = sbr.rel (0) target = $region44
          $region43: #{complex_conv2d_encoder.1} parent=39 // pred_region
            // Predicated region
            $region45: #{complex_conv2d_encoder.1} parent=43 // pred_check
              _
            $region46: #{complex_conv2d_encoder.1} parent=43 // pred_check_branch
              %485 = sbr.rel (0) target = $region48
            $region47: #{complex_conv2d_encoder.1} parent=43 // pred_region
              loop: start=0, step=1, limit=1
              $region49: #{complex_conv2d_encoder.1} parent=47 // loop_pre_header
                _
              $region50: #{complex_conv2d_encoder.1} parent=47 // loop_header
                %s487 = sphi 0, %s491
                %p488 = scmp.ge.s32.totalorder %s487, 1
                %s492 = sphi %s475, %s475
                %s493 = sphi %s481, %s481
              $region51: #{complex_conv2d_encoder.1} parent=47 // loop_header_branch
                %490 = sbr.rel (%p488) target = $region55
              $region52: #{complex_conv2d_encoder.1} parent=47 // loop_body
                %v494 = vld [vmem:[%s492] sm:$0xff]
                %495 = vst [vmem:[%s493] sm:$0xff] %v494
                %v496 = vld [vmem:[%s492 + $0x8] sm:$0xff]
                %497 = vst [vmem:[%s493 + $0x8] sm:$0xff] %v496
                %v498 = vld [vmem:[%s492 + $0x10] sm:$0xff]
                %499 = vst [vmem:[%s493 + $0x10] sm:$0xff] %v498
                %v500 = vld [vmem:[%s492 + $0x18] sm:$0xff]
                %501 = vst [vmem:[%s493 + $0x18] sm:$0xff] %v500
                %v502 = vld [vmem:[%s492 + $0x20] sm:$0xff]
                %503 = vst [vmem:[%s493 + $0x40] sm:$0xff] %v502
                %v504 = vld [vmem:[%s492 + $0x28] sm:$0xff]
                %505 = vst [vmem:[%s493 + $0x48] sm:$0xff] %v504
                %v506 = vld [vmem:[%s492 + $0x30] sm:$0xff]
                %507 = vst [vmem:[%s493 + $0x50] sm:$0xff] %v506
                %v508 = vld [vmem:[%s492 + $0x38] sm:$0xff]
                %509 = vst [vmem:[%s493 + $0x58] sm:$0xff] %v508
              $region53: #{complex_conv2d_encoder.1} parent=47 // loop_footer
                %s491 = sadd.s32 1, %s487
              $region54: #{complex_conv2d_encoder.1} parent=47 // loop_footer_branch
                %486 = sbr.rel target = $region50
              $region55: #{complex_conv2d_encoder.1} parent=47 // loop_exit
                _
            $region48: #{complex_conv2d_encoder.1} parent=43 // pred_fallthru
              _
            // Predicated region
            $region56: #{complex_conv2d_encoder.1} parent=43 // pred_check
              _
            $region57: #{complex_conv2d_encoder.1} parent=43 // pred_check_branch
              %511 = sbr.rel target = $region59
            $region58: #{complex_conv2d_encoder.1} parent=43 // pred_region
              _
            $region59: #{complex_conv2d_encoder.1} parent=43 // pred_fallthru
              _
          $region44: #{complex_conv2d_encoder.1} parent=39 // pred_fallthru
            _
          %512 = vnop
        $region40: #{complex_conv2d_encoder.1} parent=35 // pred_fallthru
          _
      $region36: #{complex_conv2d_encoder.1} parent=5 // pred_fallthru
        _
      %p513 = scmp.le.s32.totalorder 2, %s10
      // Predicated region
      $region60: #{complex_conv2d_encoder.1} parent=5 // pred_check
        %p514 = pneg %p513
      $region61: #{complex_conv2d_encoder.1} parent=5 // pred_check_branch
        %516 = sbr.rel (%p514) target = $region63
      $region62: #{complex_conv2d_encoder.1} parent=5 // pred_region
        %s517 = ssub.s32 %s10, 2
        // Predicated region
        $region64: #{complex_conv2d_encoder.1} parent=62 // pred_check
          %p518 = pneg %p137
        $region65: #{complex_conv2d_encoder.1} parent=62 // pred_check_branch
          %520 = sbr.rel (%p518) target = $region67
        $region66: #{complex_conv2d_encoder.1} parent=62 // pred_region
          %s521 = sand.u32 %s122, 1
          %s522 = sand.u32 %s122, 1
          %s523 = smul.addr %s522, 64
          %s524 = scalar_lea.vmem [#allocation2], %s523
        $region67: #{complex_conv2d_encoder.1} parent=62 // pred_fallthru
          _
      $region63: #{complex_conv2d_encoder.1} parent=5 // pred_fallthru
        _
    $region6: #{complex_conv2d_encoder.1} parent=1 // loop_footer
      %s14 = sadd.s32 1, %s10
    $region7: #{complex_conv2d_encoder.1} parent=1 // loop_footer_branch
      %9 = sbr.rel target = $region3
    $region8: #{complex_conv2d_encoder.1} parent=1 // loop_exit
      _

</llo_original>
